<compile_context>
chip_gen: v5e
topology: v5e:2x2
jax: 0.10.0
libtpu: 0.0.40
codegen_flags: <defaults>
</compile_context>

<pallas_src>
import jax
import jax.numpy as jnp
from jax.experimental import pallas as pl
from jax.experimental.pallas import tpu as pltpu


def pooling_add_kernel(lig_ref, rec_ref, lm_ref, rm_ref, w_ref, b_ref, lab_ref,
                       logits_ref, sqerr_ref,
                       acc_lig, acc_rec, den_lig, den_rec):
    si = pl.program_id(1)

    @pl.when(si == 0)
    def _init():
        acc_lig[...] = jnp.zeros_like(acc_lig)
        acc_rec[...] = jnp.zeros_like(acc_rec)
        den_lig[...] = jnp.zeros_like(den_lig)
        den_rec[...] = jnp.zeros_like(den_rec)

    lig = lig_ref[...]                     # (Bt, St, H)
    rec = rec_ref[...]
    lm = lm_ref[...]                       # (Bt, St, 1)
    rm = rm_ref[...]

    # Accumulate masked sums over the (gridded) sequence axis.
    acc_lig[...] += jnp.sum(lig * lm, axis=1)          # (Bt, H)
    acc_rec[...] += jnp.sum(rec * rm, axis=1)
    den_lig[...] += jnp.sum(lm, axis=1)                # (Bt, 1)
    den_rec[...] += jnp.sum(rm, axis=1)

    @pl.when(si == pl.num_programs(1) - 1)
    def _finalize():
        # Divide on the small (Bt, 1) denominators, then broadcast-multiply.
        inv_l = 1.0 / jnp.maximum(den_lig[...], 1e-9)
        inv_r = 1.0 / jnp.maximum(den_rec[...], 1e-9)
        pooled = acc_lig[...] * inv_l + acc_rec[...] * inv_r   # (Bt, H)

        # Linear(H, 1): VPU multiply + lane reduce; no MXU, no transpose.
        w = w_ref[...]                                         # (1, H)
        logits = jnp.sum(pooled * w, axis=-1, keepdims=True) + b_ref[...]
        logits_ref[...] = logits                               # (Bt, 1)

        # Per-sample squared error for the MSE loss.
        diff = logits - lab_ref[...]
        sqerr_ref[...] = diff * diff


_TARGET_BLOCK_BYTES = 2 * 1024 * 1024   # per embedding block (x2 streams x2 bufs)


def _pick_tiles(B, S, H, bytes_per_elem=4):
    """Pick (b_tile, s_tile) dividing (B, S) with TPU-friendly shapes."""
    # Sequence tile: multiple of 8 dividing S, as large as possible under the
    # per-block budget; otherwise the full S (correctness first).
    if S * H * bytes_per_elem <= _TARGET_BLOCK_BYTES or S % 8 != 0:
        s_tile = S
    else:
        s_tile = S
        cap = max(8, _TARGET_BLOCK_BYTES // (H * bytes_per_elem))
        best = None
        d = 8
        while d <= min(S, cap):
            if S % d == 0:
                best = d
            d += 8
        if best is not None:
            s_tile = best
    # Batch tile: divides B and is a multiple of 8 (or the full B) so the
    # (b_tile, 1) labels/logits blocks satisfy the sublane constraint.
    row_bytes = s_tile * H * bytes_per_elem
    b_budget = max(1, _TARGET_BLOCK_BYTES // row_bytes)
    if B <= b_budget or B % 8 != 0:
        b_tile = B
    else:
        b_tile = B
        best = None
        d = 8
        while d <= min(B, b_budget):
            if B % d == 0:
                best = d
            d += 8
        if best is not None:
            b_tile = best
    return b_tile, s_tile


def pooling_addition_forward(lig_embed, rec_embed, lig_mask, rec_mask,
                             out_weight, out_bias, labels):
    B, S, H = lig_embed.shape
    b_tile, s_tile = _pick_tiles(B, S, H)
    nb, ns = B // b_tile, S // s_tile

    # Masks as (B, S, 1) so the leading batch dim is a free (loop) dim.
    lm3 = lig_mask.astype(jnp.float32)[:, :, None]
    rm3 = rec_mask.astype(jnp.float32)[:, :, None]

    def emb_spec():
        return pl.BlockSpec((b_tile, s_tile, H), lambda bi, si: (bi, si, 0))

    def mask_spec():
        return pl.BlockSpec((b_tile, s_tile, 1), lambda bi, si: (bi, si, 0))

    def bvec_spec():
        # Batch-indexed (Bt, 1) block; constant across the S (reduction) axis.
        return pl.BlockSpec((b_tile, 1), lambda bi, si: (bi, 0))

    w_spec = pl.BlockSpec((1, H), lambda bi, si: (0, 0))   # resident in VMEM
    b_spec = pl.BlockSpec((1, 1), lambda bi, si: (0, 0))   # resident in VMEM

    logits, sq_err = pl.pallas_call(
        pooling_add_kernel,
        out_shape=(
            jax.ShapeDtypeStruct((B, 1), jnp.float32),
            jax.ShapeDtypeStruct((B, 1), jnp.float32),
        ),
        grid_spec=pltpu.PrefetchScalarGridSpec(
            num_scalar_prefetch=0,
            grid=(nb, ns),
            in_specs=[
                emb_spec(),    # ligand embeddings
                emb_spec(),    # receptor embeddings
                mask_spec(),   # ligand attention mask
                mask_spec(),   # receptor attention mask
                w_spec,        # output Linear weight (1, H)
                b_spec,        # output Linear bias (1, 1)
                bvec_spec(),   # labels (B, 1)
            ],
            out_specs=(
                bvec_spec(),   # logits (B, 1)
                bvec_spec(),   # per-sample squared error (B, 1)
            ),
            scratch_shapes=[
                pltpu.VMEM((b_tile, H), jnp.float32),   # ligand weighted sum
                pltpu.VMEM((b_tile, H), jnp.float32),   # receptor weighted sum
                pltpu.VMEM((b_tile, 1), jnp.float32),   # ligand mask count
                pltpu.VMEM((b_tile, 1), jnp.float32),   # receptor mask count
            ]),
        compiler_params=pltpu.CompilerParams(
            dimension_semantics=("parallel", "arbitrary"),
            vmem_limit_bytes=32 * 1024 * 1024),
    )(lig_embed, rec_embed, lm3, rm3, out_weight, out_bias, labels)

    # Tiny final reduction (B scalars) kept in the wrapper so the batch grid
    # axis can be megacore-parallel.
    loss = jnp.mean(sq_err)
    return {"logits": logits, "loss": loss}


if __name__ == "__main__":
    # Small shapes consistent with the module's forward.
    B, S, H, V = 2, 8, 32, 24

    key = jax.random.PRNGKey(0)
    k_emb, k_lig, k_rec, k_w, k_lab = jax.random.split(key, 5)

    # Synthetic deterministic "backbone": embedding table lookup (glue).
    emb_table = jax.random.normal(k_emb, (V, H), dtype=jnp.float32) * 0.02

    ligand_input_ids = jax.random.randint(k_lig, (B, S), 0, V, dtype=jnp.int32)
    receptor_input_ids = jax.random.randint(k_rec, (B, S), 0, V, dtype=jnp.int32)

    # Attention masks (pad out the tail of each sequence a bit).
    pos = jnp.arange(S)[None, :]
    ligand_attention_mask = (pos < jnp.array([[S], [S - 2]])).astype(jnp.float32)
    receptor_attention_mask = (pos < jnp.array([[S - 1], [S]])).astype(jnp.float32)

    ligand_embed = emb_table[ligand_input_ids]      # (B, S, H)
    receptor_embed = emb_table[receptor_input_ids]  # (B, S, H)

    # Output head parameters, matching reset_parameters():
    # weight ~ U(-0.1, 0.1), bias = 0.
    initrange = 0.1
    out_weight = jax.random.uniform(
        k_w, (1, H), dtype=jnp.float32, minval=-initrange, maxval=initrange)
    out_bias = jnp.zeros((1, 1), dtype=jnp.float32)

    labels = jax.random.normal(k_lab, (B, 1), dtype=jnp.float32)

    out = pooling_addition_forward(
        ligand_embed, receptor_embed,
        ligand_attention_mask, receptor_attention_mask,
        out_weight, out_bias, labels)

    jax.block_until_ready(out["logits"])
    jax.block_until_ready(out["loss"])

    # Cross-check against a pure-JAX reference.
    def ref_forward():
        lden = jnp.maximum(ligand_attention_mask.sum(1, keepdims=True), 1e-9)
        rden = jnp.maximum(receptor_attention_mask.sum(1, keepdims=True), 1e-9)
        p_l = (ligand_embed * ligand_attention_mask[:, :, None]).sum(1) / lden
        p_r = (receptor_embed * receptor_attention_mask[:, :, None]).sum(1) / rden
        pooled = p_l + p_r
        logits = pooled @ out_weight.T + out_bias
        loss = jnp.mean((logits - labels) ** 2)
        return logits, loss

    ref_logits, ref_loss = ref_forward()
    assert jnp.allclose(out["logits"], ref_logits, atol=1e-5, rtol=1e-5)
    assert jnp.allclose(out["loss"], ref_loss, atol=1e-5, rtol=1e-5)

    print("KERNEL_OK")
</pallas_src>

<mosaic_0001>
module attributes {stable_mosaic.version = 11 : i64} {
  func.func @pooling_add_kernel(%arg0: i32, %arg1: i32, %arg2: memref<2x8x32xf32, #tpu.memory_space<vmem>>, %arg3: memref<2x8x32xf32, #tpu.memory_space<vmem>>, %arg4: memref<2x8x1xf32, #tpu.memory_space<vmem>>, %arg5: memref<2x8x1xf32, #tpu.memory_space<vmem>>, %arg6: memref<1x32xf32, #tpu.memory_space<vmem>>, %arg7: memref<1x1xf32, #tpu.memory_space<vmem>>, %arg8: memref<2x1xf32, #tpu.memory_space<vmem>>, %arg9: memref<2x1xf32, #tpu.memory_space<vmem>>, %arg10: memref<2x1xf32, #tpu.memory_space<vmem>>, %arg11: memref<2x32xf32, #tpu.memory_space<vmem>>, %arg12: memref<2x32xf32, #tpu.memory_space<vmem>>, %arg13: memref<2x1xf32, #tpu.memory_space<vmem>>, %arg14: memref<2x1xf32, #tpu.memory_space<vmem>>) attributes {dimension_semantics = [#tpu.dimension_semantics<parallel>, #tpu.dimension_semantics<arbitrary>], iteration_bounds = array<i64: 1, 1>, scalar_prefetch = 0 : i64, scratch_operands = 4 : i64, tpu.core_type = #tpu.core_type<tc>, window_params = [{transform_indices = @transform_0, window_bounds = array<i64: 2, 8, 32>}, {transform_indices = @transform_1, window_bounds = array<i64: 2, 8, 32>}, {transform_indices = @transform_2, window_bounds = array<i64: 2, 8, 1>}, {transform_indices = @transform_3, window_bounds = array<i64: 2, 8, 1>}, {pipeline_mode = #tpu.pipeline_mode<synchronous>, transform_indices = @transform_4, window_bounds = array<i64: 1, 32>}, {pipeline_mode = #tpu.pipeline_mode<synchronous>, transform_indices = @transform_5, window_bounds = array<i64: 1, 1>}, {transform_indices = @transform_6, window_bounds = array<i64: 2, 1>}, {transform_indices = @transform_7, window_bounds = array<i64: 2, 1>}, {transform_indices = @transform_8, window_bounds = array<i64: 2, 1>}]} {
    %c0_i32 = arith.constant 0 : i32
    %0 = arith.cmpi eq, %arg1, %c0_i32 : i32
    %1 = arith.extui %0 : i1 to i32
    %c0_i32_0 = arith.constant 0 : i32
    %2 = arith.cmpi ne, %1, %c0_i32_0 : i32
    scf.if %2 {
      %cst_33 = arith.constant 0.000000e+00 : f32
      %30 = vector.broadcast %cst_33 : f32 to vector<2x32xf32>
      %c0_34 = arith.constant 0 : index
      %c0_35 = arith.constant 0 : index
      %31 = vector.load %arg11[%c0_34, %c0_35] : memref<2x32xf32, #tpu.memory_space<vmem>>, vector<2x32xf32>
      tpu.vector_store %arg11[%c0_34, %c0_35], %30 {strides = array<i32>} : memref<2x32xf32, #tpu.memory_space<vmem>>, vector<2x32xf32>,
      %cst_36 = arith.constant 0.000000e+00 : f32
      %32 = vector.broadcast %cst_36 : f32 to vector<2x32xf32>
      %c0_37 = arith.constant 0 : index
      %c0_38 = arith.constant 0 : index
      %33 = vector.load %arg12[%c0_37, %c0_38] : memref<2x32xf32, #tpu.memory_space<vmem>>, vector<2x32xf32>
      tpu.vector_store %arg12[%c0_37, %c0_38], %32 {strides = array<i32>} : memref<2x32xf32, #tpu.memory_space<vmem>>, vector<2x32xf32>,
      %cst_39 = arith.constant 0.000000e+00 : f32
      %34 = vector.broadcast %cst_39 : f32 to vector<2x1xf32>
      %c0_40 = arith.constant 0 : index
      %c0_41 = arith.constant 0 : index
      %35 = vector.load %arg13[%c0_40, %c0_41] : memref<2x1xf32, #tpu.memory_space<vmem>>, vector<2x1xf32>
      tpu.vector_store %arg13[%c0_40, %c0_41], %34 {strides = array<i32>} : memref<2x1xf32, #tpu.memory_space<vmem>>, vector<2x1xf32>,
      %cst_42 = arith.constant 0.000000e+00 : f32
      %36 = vector.broadcast %cst_42 : f32 to vector<2x1xf32>
      %c0_43 = arith.constant 0 : index
      %c0_44 = arith.constant 0 : index
      %37 = vector.load %arg14[%c0_43, %c0_44] : memref<2x1xf32, #tpu.memory_space<vmem>>, vector<2x1xf32>
      tpu.vector_store %arg14[%c0_43, %c0_44], %36 {strides = array<i32>} : memref<2x1xf32, #tpu.memory_space<vmem>>, vector<2x1xf32>,
    } else {
    }
    %c0 = arith.constant 0 : index
    %c0_1 = arith.constant 0 : index
    %c0_2 = arith.constant 0 : index
    %3 = vector.load %arg2[%c0, %c0_1, %c0_2] : memref<2x8x32xf32, #tpu.memory_space<vmem>>, vector<2x8x32xf32>
    %c0_3 = arith.constant 0 : index
    %c0_4 = arith.constant 0 : index
    %c0_5 = arith.constant 0 : index
    %4 = vector.load %arg3[%c0_3, %c0_4, %c0_5] : memref<2x8x32xf32, #tpu.memory_space<vmem>>, vector<2x8x32xf32>
    %c0_6 = arith.constant 0 : index
    %c0_7 = arith.constant 0 : index
    %c0_8 = arith.constant 0 : index
    %5 = vector.load %arg4[%c0_6, %c0_7, %c0_8] : memref<2x8x1xf32, #tpu.memory_space<vmem>>, vector<2x8x1xf32>
    %c0_9 = arith.constant 0 : index
    %c0_10 = arith.constant 0 : index
    %c0_11 = arith.constant 0 : index
    %6 = vector.load %arg5[%c0_9, %c0_10, %c0_11] : memref<2x8x1xf32, #tpu.memory_space<vmem>>, vector<2x8x1xf32>
    %c0_12 = arith.constant 0 : index
    %c0_13 = arith.constant 0 : index
    %7 = vector.load %arg11[%c0_12, %c0_13] : memref<2x32xf32, #tpu.memory_space<vmem>>, vector<2x32xf32>
    %8 = vector.broadcast %5 : vector<2x8x1xf32> to vector<2x8x32xf32>
    %9 = arith.mulf %3, %8 : vector<2x8x32xf32>
    %cst = arith.constant dense<0.000000e+00> : vector<2x32xf32>
    %10 = vector.multi_reduction <add>, %9, %cst [1] : vector<2x8x32xf32> to vector<2x32xf32>
    %11 = arith.addf %7, %10 : vector<2x32xf32>
    %c0_14 = arith.constant 0 : index
    %c0_15 = arith.constant 0 : index
    %12 = vector.load %arg11[%c0_14, %c0_15] : memref<2x32xf32, #tpu.memory_space<vmem>>, vector<2x32xf32>
    tpu.vector_store %arg11[%c0_14, %c0_15], %11 {strides = array<i32>} : memref<2x32xf32, #tpu.memory_space<vmem>>, vector<2x32xf32>,
    %c0_16 = arith.constant 0 : index
    %c0_17 = arith.constant 0 : index
    %13 = vector.load %arg12[%c0_16, %c0_17] : memref<2x32xf32, #tpu.memory_space<vmem>>, vector<2x32xf32>
    %14 = vector.broadcast %6 : vector<2x8x1xf32> to vector<2x8x32xf32>
    %15 = arith.mulf %4, %14 : vector<2x8x32xf32>
    %cst_18 = arith.constant dense<0.000000e+00> : vector<2x32xf32>
    %16 = vector.multi_reduction <add>, %15, %cst_18 [1] : vector<2x8x32xf32> to vector<2x32xf32>
    %17 = arith.addf %13, %16 : vector<2x32xf32>
    %c0_19 = arith.constant 0 : index
    %c0_20 = arith.constant 0 : index
    %18 = vector.load %arg12[%c0_19, %c0_20] : memref<2x32xf32, #tpu.memory_space<vmem>>, vector<2x32xf32>
    tpu.vector_store %arg12[%c0_19, %c0_20], %17 {strides = array<i32>} : memref<2x32xf32, #tpu.memory_space<vmem>>, vector<2x32xf32>,
    %c0_21 = arith.constant 0 : index
    %c0_22 = arith.constant 0 : index
    %19 = vector.load %arg13[%c0_21, %c0_22] : memref<2x1xf32, #tpu.memory_space<vmem>>, vector<2x1xf32>
    %cst_23 = arith.constant dense<0.000000e+00> : vector<2x1xf32>
    %20 = vector.multi_reduction <add>, %5, %cst_23 [1] : vector<2x8x1xf32> to vector<2x1xf32>
    %21 = arith.addf %19, %20 : vector<2x1xf32>
    %c0_24 = arith.constant 0 : index
    %c0_25 = arith.constant 0 : index
    %22 = vector.load %arg13[%c0_24, %c0_25] : memref<2x1xf32, #tpu.memory_space<vmem>>, vector<2x1xf32>
    tpu.vector_store %arg13[%c0_24, %c0_25], %21 {strides = array<i32>} : memref<2x1xf32, #tpu.memory_space<vmem>>, vector<2x1xf32>,
    %c0_26 = arith.constant 0 : index
    %c0_27 = arith.constant 0 : index
    %23 = vector.load %arg14[%c0_26, %c0_27] : memref<2x1xf32, #tpu.memory_space<vmem>>, vector<2x1xf32>
    %cst_28 = arith.constant dense<0.000000e+00> : vector<2x1xf32>
    %24 = vector.multi_reduction <add>, %6, %cst_28 [1] : vector<2x8x1xf32> to vector<2x1xf32>
    %25 = arith.addf %23, %24 : vector<2x1xf32>
    %c0_29 = arith.constant 0 : index
    %c0_30 = arith.constant 0 : index
    %26 = vector.load %arg14[%c0_29, %c0_30] : memref<2x1xf32, #tpu.memory_space<vmem>>, vector<2x1xf32>
    tpu.vector_store %arg14[%c0_29, %c0_30], %25 {strides = array<i32>} : memref<2x1xf32, #tpu.memory_space<vmem>>, vector<2x1xf32>,
    %c0_i32_31 = arith.constant 0 : i32
    %27 = arith.cmpi eq, %arg1, %c0_i32_31 : i32
    %28 = arith.extui %27 : i1 to i32
    %c0_i32_32 = arith.constant 0 : i32
    %29 = arith.cmpi ne, %28, %c0_i32_32 : i32
    scf.if %29 {
      %c0_33 = arith.constant 0 : index
      %c0_34 = arith.constant 0 : index
      %30 = vector.load %arg13[%c0_33, %c0_34] : memref<2x1xf32, #tpu.memory_space<vmem>>, vector<2x1xf32>
      %cst_35 = arith.constant 9.99999971E-10 : f32
      %31 = vector.broadcast %cst_35 : f32 to vector<2x1xf32>
      %32 = arith.maximumf %30, %31 : vector<2x1xf32>
      %cst_36 = arith.constant 1.000000e+00 : f32
      %33 = vector.broadcast %cst_36 : f32 to vector<2x1xf32>
      %34 = arith.divf %33, %32 : vector<2x1xf32>
      %c0_37 = arith.constant 0 : index
      %c0_38 = arith.constant 0 : index
      %35 = vector.load %arg14[%c0_37, %c0_38] : memref<2x1xf32, #tpu.memory_space<vmem>>, vector<2x1xf32>
      %cst_39 = arith.constant 9.99999971E-10 : f32
      %36 = vector.broadcast %cst_39 : f32 to vector<2x1xf32>
      %37 = arith.maximumf %35, %36 : vector<2x1xf32>
      %cst_40 = arith.constant 1.000000e+00 : f32
      %38 = vector.broadcast %cst_40 : f32 to vector<2x1xf32>
      %39 = arith.divf %38, %37 : vector<2x1xf32>
      %c0_41 = arith.constant 0 : index
      %c0_42 = arith.constant 0 : index
      %40 = vector.load %arg11[%c0_41, %c0_42] : memref<2x32xf32, #tpu.memory_space<vmem>>, vector<2x32xf32>
      %41 = vector.broadcast %34 : vector<2x1xf32> to vector<2x32xf32>
      %42 = arith.mulf %40, %41 : vector<2x32xf32>
      %c0_43 = arith.constant 0 : index
      %c0_44 = arith.constant 0 : index
      %43 = vector.load %arg12[%c0_43, %c0_44] : memref<2x32xf32, #tpu.memory_space<vmem>>, vector<2x32xf32>
      %44 = vector.broadcast %39 : vector<2x1xf32> to vector<2x32xf32>
      %45 = arith.mulf %43, %44 : vector<2x32xf32>
      %46 = arith.addf %42, %45 : vector<2x32xf32>
      %c0_45 = arith.constant 0 : index
      %c0_46 = arith.constant 0 : index
      %47 = vector.load %arg6[%c0_45, %c0_46] : memref<1x32xf32, #tpu.memory_space<vmem>>, vector<1x32xf32>
      %48 = vector.broadcast %47 : vector<1x32xf32> to vector<2x32xf32>
      %49 = arith.mulf %46, %48 : vector<2x32xf32>
      %cst_47 = arith.constant dense<0.000000e+00> : vector<2xf32>
      %50 = vector.multi_reduction <add>, %49, %cst_47 [1] : vector<2x32xf32> to vector<2xf32>
      %51 = vector.shape_cast %50 : vector<2xf32> to vector<2x1xf32>
      %c0_48 = arith.constant 0 : index
      %c0_49 = arith.constant 0 : index
      %52 = vector.load %arg7[%c0_48, %c0_49] : memref<1x1xf32, #tpu.memory_space<vmem>>, vector<1x1xf32>
      %53 = vector.broadcast %52 : vector<1x1xf32> to vector<2x1xf32>
      %54 = arith.addf %51, %53 : vector<2x1xf32>
      %c0_50 = arith.constant 0 : index
      %c0_51 = arith.constant 0 : index
      %55 = vector.load %arg9[%c0_50, %c0_51] : memref<2x1xf32, #tpu.memory_space<vmem>>, vector<2x1xf32>
      tpu.vector_store %arg9[%c0_50, %c0_51], %54 {strides = array<i32>} : memref<2x1xf32, #tpu.memory_space<vmem>>, vector<2x1xf32>,
      %c0_52 = arith.constant 0 : index
      %c0_53 = arith.constant 0 : index
      %56 = vector.load %arg8[%c0_52, %c0_53] : memref<2x1xf32, #tpu.memory_space<vmem>>, vector<2x1xf32>
      %57 = arith.subf %54, %56 : vector<2x1xf32>
      %58 = arith.mulf %57, %57 : vector<2x1xf32>
      %c0_54 = arith.constant 0 : index
      %c0_55 = arith.constant 0 : index
      %59 = vector.load %arg10[%c0_54, %c0_55] : memref<2x1xf32, #tpu.memory_space<vmem>>, vector<2x1xf32>
      tpu.vector_store %arg10[%c0_54, %c0_55], %58 {strides = array<i32>} : memref<2x1xf32, #tpu.memory_space<vmem>>, vector<2x1xf32>,
    } else {
    }
    return
  }
  func.func @transform_0(%arg0: i32, %arg1: i32) -> (i32, i32, i32) {
    %c0_i32 = arith.constant 0 : i32
    %c0_i32_0 = arith.constant 0 : i32
    return %arg0, %arg1, %c0_i32 : i32, i32, i32
  }
  func.func @transform_1(%arg0: i32, %arg1: i32) -> (i32, i32, i32) {
    %c0_i32 = arith.constant 0 : i32
    %c0_i32_0 = arith.constant 0 : i32
    return %arg0, %arg1, %c0_i32 : i32, i32, i32
  }
  func.func @transform_2(%arg0: i32, %arg1: i32) -> (i32, i32, i32) {
    %c0_i32 = arith.constant 0 : i32
    %c0_i32_0 = arith.constant 0 : i32
    return %arg0, %arg1, %c0_i32 : i32, i32, i32
  }
  func.func @transform_3(%arg0: i32, %arg1: i32) -> (i32, i32, i32) {
    %c0_i32 = arith.constant 0 : i32
    %c0_i32_0 = arith.constant 0 : i32
    return %arg0, %arg1, %c0_i32 : i32, i32, i32
  }
  func.func @transform_4(%arg0: i32, %arg1: i32) -> (i32, i32) {
    %c0_i32 = arith.constant 0 : i32
    %c0_i32_0 = arith.constant 0 : i32
    %c0_i32_1 = arith.constant 0 : i32
    return %c0_i32, %c0_i32_0 : i32, i32
  }
  func.func @transform_5(%arg0: i32, %arg1: i32) -> (i32, i32) {
    %c0_i32 = arith.constant 0 : i32
    %c0_i32_0 = arith.constant 0 : i32
    %c0_i32_1 = arith.constant 0 : i32
    return %c0_i32, %c0_i32_0 : i32, i32
  }
  func.func @transform_6(%arg0: i32, %arg1: i32) -> (i32, i32) {
    %c0_i32 = arith.constant 0 : i32
    %c0_i32_0 = arith.constant 0 : i32
    return %arg0, %c0_i32 : i32, i32
  }
  func.func @transform_7(%arg0: i32, %arg1: i32) -> (i32, i32) {
    %c0_i32 = arith.constant 0 : i32
    %c0_i32_0 = arith.constant 0 : i32
    return %arg0, %c0_i32 : i32, i32
  }
  func.func @transform_8(%arg0: i32, %arg1: i32) -> (i32, i32) {
    %c0_i32 = arith.constant 0 : i32
    %c0_i32_0 = arith.constant 0 : i32
    return %arg0, %c0_i32 : i32, i32
  }
}

</mosaic_0001>

<llo_original>
// kernel: tpu_custom_call.1
$region0: #{tpu_custom_call.1}
  #allocation0 [shape = 'u32[]', space=smem, size = 0x4, offset = 0x4, fixed_abs, tag = 'smem constant byte address 0x4 - core index']
  #allocation1 [shape = 'u32[72,128]{1,0:T(1,128)}', space=vmem, size = 0x9000, scoped, tag = 'internal scratch']
  #allocation2 [shape = 'f32[2,32]{1,0:T(2,128)}', space=vmem, size = 0x400, scoped, tag = 'scratch operand']
  #allocation3 [shape = 'f32[2,32]{1,0:T(2,128)}', space=vmem, size = 0x400, scoped, tag = 'scratch operand']
  #allocation4 [shape = 'f32[2,1]{1,0:T(2,128)}', space=vmem, size = 0x400, scoped, tag = 'scratch operand']
  #allocation5 [shape = 'f32[2,1]{1,0:T(2,128)}', space=vmem, size = 0x400, scoped, tag = 'scratch operand']
  #allocation6 [shape = 'f32[1,1]{1,0:T(1,128)S(1)}', space=vmem, size = 0x200, scoped, tag = 'scoped memory for tpu_custom_call.1']
  %s0 = inlined_call_operand.vmem [shape: f32[2,8,32], index: 0, kind: input, shape index: {}]
  %s1 = inlined_call_operand.vmem [shape: f32[2,8,32], index: 1, kind: input, shape index: {}]
  %s2 = inlined_call_operand.vmem [shape: f32[2,8,1], index: 2, kind: input, shape index: {}]
  %s3 = inlined_call_operand.vmem [shape: f32[2,8,1], index: 3, kind: input, shape index: {}]
  %s4 = inlined_call_operand.vmem [shape: f32[1,32], index: 4, kind: input, shape index: {}]
  %s5 = inlined_call_operand.<no memory space> [shape: f32[1,1], index: 5, kind: input, shape index: {}]
  %s6 = inlined_call_operand.vmem [shape: f32[2,1], index: 6, kind: input, shape index: {}]
  %s7 = inlined_call_operand.vmem [shape: f32[2,1], index: 7, kind: output, shape index: {0}]
  %s8 = inlined_call_operand.vmem [shape: f32[2,1], index: 8, kind: output, shape index: {1}]
  %9 = xla_tuple %s7, %s8
  %s10 = sld [smem:[#allocation0]]
  $region54: #{tpu_custom_call.1} parent=0
    _
  %s12 = ssub.s32 1, %s10
  %s13 = scalar_select 0, %s12, %s10
  %v14 = vstv %s5
  %15 = vst [vmem:[#allocation6] sm:$0x1] %v14
  // Predicated region
  $region2: #{tpu_custom_call.1} parent=0 // pred_check
    _
  $region3: #{tpu_custom_call.1} parent=0 // pred_check_branch
    %17 = sbr.rel (0) target = $region5
  $region4: #{tpu_custom_call.1} parent=0 // pred_region
    _
  $region5: #{tpu_custom_call.1} parent=0 // pred_fallthru
    _
  // Predicated region
  $region6: #{tpu_custom_call.1} parent=0 // pred_check
    _
  $region7: #{tpu_custom_call.1} parent=0 // pred_check_branch
    %19 = sbr.rel (0) target = $region9
  $region8: #{tpu_custom_call.1} parent=0 // pred_region
    _
  $region9: #{tpu_custom_call.1} parent=0 // pred_fallthru
    _
  // Predicated region
  $region10: #{tpu_custom_call.1} parent=0 // pred_check
    _
  $region11: #{tpu_custom_call.1} parent=0 // pred_check_branch
    %21 = sbr.rel (0) target = $region13
  $region12: #{tpu_custom_call.1} parent=0 // pred_region
    _
  $region13: #{tpu_custom_call.1} parent=0 // pred_fallthru
    _
  // Predicated region
  $region14: #{tpu_custom_call.1} parent=0 // pred_check
    _
  $region15: #{tpu_custom_call.1} parent=0 // pred_check_branch
    %23 = sbr.rel (0) target = $region17
  $region16: #{tpu_custom_call.1} parent=0 // pred_region
    _
  $region17: #{tpu_custom_call.1} parent=0 // pred_fallthru
    _
  // Predicated region
  $region18: #{tpu_custom_call.1} parent=0 // pred_check
    _
  $region19: #{tpu_custom_call.1} parent=0 // pred_check_branch
    %25 = sbr.rel (0) target = $region21
  $region20: #{tpu_custom_call.1} parent=0 // pred_region
    _
  $region21: #{tpu_custom_call.1} parent=0 // pred_fallthru
    _
  // Predicated region
  $region22: #{tpu_custom_call.1} parent=0 // pred_check
    _
  $region23: #{tpu_custom_call.1} parent=0 // pred_check_branch
    %27 = sbr.rel (0) target = $region25
  $region24: #{tpu_custom_call.1} parent=0 // pred_region
    _
  $region25: #{tpu_custom_call.1} parent=0 // pred_fallthru
    _
  // Predicated region
  $region26: #{tpu_custom_call.1} parent=0 // pred_check
    _
  $region27: #{tpu_custom_call.1} parent=0 // pred_check_branch
    %29 = sbr.rel (0) target = $region29
  $region28: #{tpu_custom_call.1} parent=0 // pred_region
    _
  $region29: #{tpu_custom_call.1} parent=0 // pred_fallthru
    _
  %p30 = scmp.eq.s32.totalorder 0, 0
  // Predicated region
  $region30: #{tpu_custom_call.1} parent=0 // pred_check
    %p31 = pneg %p30
  $region31: #{tpu_custom_call.1} parent=0 // pred_check_branch
    %33 = sbr.rel (%p31) target = $region33
  $region32: #{tpu_custom_call.1} parent=0 // pred_region
    %vm34 = vcmask 254976
    %35 = vst.msk [vmem:[#allocation2] sm:$0x3] %vm34, 0.0
    %36 = vst.msk [vmem:[#allocation3] sm:$0x3] %vm34, 0.0
    %vm37 = vcmask 1024
    %38 = vst.msk [vmem:[#allocation4] sm:$0x3] %vm37, 0.0
    %39 = vst.msk [vmem:[#allocation5] sm:$0x3] %vm37, 0.0
  $region33: #{tpu_custom_call.1} parent=0 // pred_fallthru
    _
  %v40 = vld [vmem:[%s0] sm:$0xff]
  %v41 = vld [vmem:[%s0 + $0x8] sm:$0xff]
  %v42 = vld [vmem:[%s1] sm:$0xff]
  %v43 = vld [vmem:[%s1 + $0x8] sm:$0xff]
  %v44 = vld [vmem:[%s2] sm:$0xff]
  %v45 = vld [vmem:[%s2 + $0x8] sm:$0xff]
  %v46 = vld [vmem:[%s3] sm:$0xff]
  %v47 = vld [vmem:[%s3 + $0x8] sm:$0xff]
  %v48 = vld [vmem:[#allocation2] sm:$0x3]
  %50 = vset.pattern.permute.xlu0 0
  %51 = vperm.xlu0 %50, %v44
  %v52 = vpop.permute.xlu0 %51
  %55 = vset.pattern.permute.xlu0 0
  %56 = vperm.xlu0 %55, %v45
  %v57 = vpop.permute.xlu0 %56
  %v59 = vmul.f32 %v40, %v52
  %v60 = vmul.f32 %v41, %v57
  %vm61 = vcmask 261120
  %v62 = vsel %vm61, %v59, 0.0
  %v63 = vrot.slane %v62, 4
  %v64 = vadd.f32 %v62, %v63
  %v65 = vrot.slane %v64, 2
  %v66 = vadd.f32 %v64, %v65
  %v67 = vrot.slane %v66, 1
  %v68 = vadd.f32 %v66, %v67
  %v69 = vsel %vm61, %v60, 0.0
  %v70 = vrot.slane %v69, 4
  %v71 = vadd.f32 %v69, %v70
  %v72 = vrot.slane %v71, 2
  %v73 = vadd.f32 %v71, %v72
  %v74 = vrot.slane %v73, 1
  %v75 = vadd.f32 %v73, %v74
  %vm78 = vcmask 1041409
  %v79 = vsel %vm78, %v75, %v68
  %v81 = vadd.f32 %v48, %v79
  %vm82 = vcmask 254976
  %83 = vst.msk [vmem:[#allocation2] sm:$0x3] %vm82, %v81
  %v84 = vld [vmem:[#allocation3] sm:$0x3]
  %86 = vset.pattern.permute.xlu0 0
  %87 = vperm.xlu0 %86, %v46
  %v88 = vpop.permute.xlu0 %87
  %91 = vset.pattern.permute.xlu0 0
  %92 = vperm.xlu0 %91, %v47
  %v93 = vpop.permute.xlu0 %92
  %v95 = vmul.f32 %v42, %v88
  %v96 = vmul.f32 %v43, %v93
  %v97 = vsel %vm61, %v95, 0.0
  %v98 = vrot.slane %v97, 4
  %v99 = vadd.f32 %v97, %v98
  %v100 = vrot.slane %v99, 2
  %v101 = vadd.f32 %v99, %v100
  %v102 = vrot.slane %v101, 1
  %v103 = vadd.f32 %v101, %v102
  %v104 = vsel %vm61, %v96, 0.0
  %v105 = vrot.slane %v104, 4
  %v106 = vadd.f32 %v104, %v105
  %v107 = vrot.slane %v106, 2
  %v108 = vadd.f32 %v106, %v107
  %v109 = vrot.slane %v108, 1
  %v110 = vadd.f32 %v108, %v109
  %v113 = vsel %vm78, %v110, %v103
  %v115 = vadd.f32 %v84, %v113
  %116 = vst.msk [vmem:[#allocation3] sm:$0x3] %vm82, %v115
  %v117 = vld [vmem:[#allocation4] sm:$0x3]
  %vm118 = vcmask 7168
  %v119 = vsel %vm118, %v44, 0.0
  %v120 = vrot.slane %v119, 4
  %v121 = vadd.f32 %v119, %v120
  %v122 = vrot.slane %v121, 2
  %v123 = vadd.f32 %v121, %v122
  %v124 = vrot.slane %v123, 1
  %v125 = vadd.f32 %v123, %v124
  %v126 = vsel %vm118, %v45, 0.0
  %v127 = vrot.slane %v126, 4
  %v128 = vadd.f32 %v126, %v127
  %v129 = vrot.slane %v128, 2
  %v130 = vadd.f32 %v128, %v129
  %v131 = vrot.slane %v130, 1
  %v132 = vadd.f32 %v130, %v131
  %v135 = vsel %vm78, %v132, %v125
  %v137 = vadd.f32 %v117, %v135
  %vm138 = vcmask 1024
  %139 = vst.msk [vmem:[#allocation4] sm:$0x3] %vm138, %v137
  %v140 = vld [vmem:[#allocation5] sm:$0x3]
  %v141 = vsel %vm118, %v46, 0.0
  %v142 = vrot.slane %v141, 4
  %v143 = vadd.f32 %v141, %v142
  %v144 = vrot.slane %v143, 2
  %v145 = vadd.f32 %v143, %v144
  %v146 = vrot.slane %v145, 1
  %v147 = vadd.f32 %v145, %v146
  %v148 = vsel %vm118, %v47, 0.0
  %v149 = vrot.slane %v148, 4
  %v150 = vadd.f32 %v148, %v149
  %v151 = vrot.slane %v150, 2
  %v152 = vadd.f32 %v150, %v151
  %v153 = vrot.slane %v152, 1
  %v154 = vadd.f32 %v152, %v153
  %v157 = vsel %vm78, %v154, %v147
  %v159 = vadd.f32 %v140, %v157
  %160 = vst.msk [vmem:[#allocation5] sm:$0x3] %vm138, %v159
  // Predicated region
  $region34: #{tpu_custom_call.1} parent=0 // pred_check
    %p161 = pneg %p30
  $region35: #{tpu_custom_call.1} parent=0 // pred_check_branch
    %163 = sbr.rel (%p161) target = $region37
  $region36: #{tpu_custom_call.1} parent=0 // pred_region
    %v164 = vld [vmem:[#allocation4] sm:$0x3]
    %v165 = vmax.f32 %v164, 1e-09
    %v166 = vrcp.pop %v165
    %v167 = vmul.f32 %v165, %v166
    %v168 = vsub.f32 1.0, %v167
    %v169 = vmul.f32 %v166, %v168
    %v170 = vadd.f32 %v166, %v169
    %vm171 = vweird.f32 %v165
    %vm172 = vweird.f32 %v166
    %vm173 = vmor %vm171, %vm172
    %v174 = vsel %vm173, %v166, %v170
    %v175 = vand.u32 2147483647, %v165
    %vm176 = vcmp.eq.f32.partialorder %v175, 8.507059e+37
    %v177 = vand.u32 %v165, 2147483648
    %v178 = vor.u32 1.1754944e-38, %v177
    %v179 = vsel %vm176, %v178, %v174
    %v180 = vmul.f32 1.0, %v179
    %v181 = vld [vmem:[#allocation5] sm:$0x3]
    %v182 = vmax.f32 %v181, 1e-09
    %v183 = vrcp.pop %v182
    %v184 = vmul.f32 %v182, %v183
    %v185 = vsub.f32 1.0, %v184
    %v186 = vmul.f32 %v183, %v185
    %v187 = vadd.f32 %v183, %v186
    %vm188 = vweird.f32 %v182
    %vm189 = vweird.f32 %v183
    %vm190 = vmor %vm188, %vm189
    %v191 = vsel %vm190, %v183, %v187
    %v192 = vand.u32 2147483647, %v182
    %vm193 = vcmp.eq.f32.partialorder %v192, 8.507059e+37
    %v194 = vand.u32 %v182, 2147483648
    %v195 = vor.u32 1.1754944e-38, %v194
    %v196 = vsel %vm193, %v195, %v191
    %v197 = vmul.f32 1.0, %v196
    %v198 = vld [vmem:[#allocation2] sm:$0x3]
    %200 = vset.pattern.permute.xlu0 0
    %201 = vperm.xlu0 %200, %v180
    %v202 = vpop.permute.xlu0 %201
    %v204 = vmul.f32 %v198, %v202
    %v205 = vld [vmem:[#allocation3] sm:$0x3]
    %207 = vset.pattern.permute.xlu0 0
    %208 = vperm.xlu0 %207, %v197
    %v209 = vpop.permute.xlu0 %208
    %v211 = vmul.f32 %v205, %v209
    %v212 = vadd.f32 %v204, %v211
    %v213 = vld [vmem:[%s4] sm:$0x1]
    %v215 = vperm.slane %v213, 0
    %v217 = vmul.f32 %v212, %v215
    %v218 = vsel %vm82, %v217, 0.0
    %219 = vadd.xlane.f32.xlu0 %v218
    %v220 = vpop.xlane.xlu0 %219
    %v221 = vld [vmem:[#allocation6] sm:$0x1]
    %v223 = vperm.slane %v221, 0
    %v225 = vadd.f32 %v220, %v223
    %226 = vst.msk [vmem:[%s7] sm:$0x3] %vm138, %v225
    %v227 = vld [vmem:[%s6] sm:$0x3]
    %v228 = vsub.f32 %v225, %v227
    %v229 = vmul.f32 %v228, %v228
    %230 = vst.msk [vmem:[%s8] sm:$0x3] %vm138, %v229
  $region37: #{tpu_custom_call.1} parent=0 // pred_fallthru
    _
  // Predicated region
  $region38: #{tpu_custom_call.1} parent=0 // pred_check
    _
  $region39: #{tpu_custom_call.1} parent=0 // pred_check_branch
    %232 = sbr.rel (0) target = $region41
  $region40: #{tpu_custom_call.1} parent=0 // pred_region
    _
  $region41: #{tpu_custom_call.1} parent=0 // pred_fallthru
    _
  // Predicated region
  $region42: #{tpu_custom_call.1} parent=0 // pred_check
    _
  $region43: #{tpu_custom_call.1} parent=0 // pred_check_branch
    %234 = sbr.rel (0) target = $region45
  $region44: #{tpu_custom_call.1} parent=0 // pred_region
    _
  $region45: #{tpu_custom_call.1} parent=0 // pred_fallthru
    _
  // Predicated region
  $region46: #{tpu_custom_call.1} parent=0 // pred_check
    _
  $region47: #{tpu_custom_call.1} parent=0 // pred_check_branch
    %236 = sbr.rel (0) target = $region49
  $region48: #{tpu_custom_call.1} parent=0 // pred_region
    _
  $region49: #{tpu_custom_call.1} parent=0 // pred_fallthru
    _
  // Predicated region
  $region50: #{tpu_custom_call.1} parent=0 // pred_check
    _
  $region51: #{tpu_custom_call.1} parent=0 // pred_check_branch
    %238 = sbr.rel (0) target = $region53
  $region52: #{tpu_custom_call.1} parent=0 // pred_region
    _
  $region53: #{tpu_custom_call.1} parent=0 // pred_fallthru
    _

</llo_original>
